<compile_context>
chip_gen: v6e
topology: v6e:2x2x1
jax: 0.10.0
libtpu: 0.0.40
codegen_flags: <defaults>
</compile_context>

<pallas_src>
import jax
import jax.numpy as jnp
from jax.experimental import pallas as pl
from jax.experimental.pallas import tpu as pltpu


_LANE_CANDIDATES = (1024, 512, 256, 128)   # lane-dense last dims (multiples of 128)


def _round_up(n: int, m: int) -> int:
    return ((n + m - 1) // m) * m


def _target_block_bytes() -> int:
    """Per-buffer block-size target in bytes, chosen per TPU generation."""
    try:
        kind = jax.devices()[0].device_kind.lower()
    except Exception:
        return 2 << 20
    if "7" in kind:          # v7x: ~3.2 TB/s HBM -> bigger blocks amortize per-step cost
        return 8 << 20
    if "v6" in kind:         # v6e: 128 MiB VMEM, ~1.4 TB/s
        return 4 << 20
    return 2 << 20           # v5e and older: already ~93% step-efficient at 2 MiB


def _scale_kernel(scale_ref, x_ref, o_ref):
    # scale_ref: (1,) float32 scalar in SMEM.
    # Multiply in the *output* dtype: f32 stays f32, bf16 stays on the bf16
    # VALU path (v6e/v7x), integer inputs are upcast to f32 (PyTorch promotion).
    s = scale_ref[0].astype(o_ref.dtype)
    o_ref[...] = x_ref[...].astype(o_ref.dtype) * s


def voltage_scaler(x: jax.Array, scale,
                   *,
                   small_fallback: bool = True,
                   donate_input: bool = False,
                   max_block_rows: int | None = None) -> jax.Array:
    """Elementwise x * scale, matching VoltageScaler.forward semantics."""
    orig_shape = x.shape
    # PyTorch promotion with a 0-dim float32 buffer: floating tensors keep
    # their dtype (bf16 * f32-scalar-tensor -> bf16); integers promote to f32.
    if jnp.issubdtype(x.dtype, jnp.floating):
        out_dtype = jnp.dtype(x.dtype)
    else:
        out_dtype = jnp.dtype(jnp.float32)

    total = int(x.size)
    itemsize = max(jnp.dtype(x.dtype).itemsize, out_dtype.itemsize)
    block_bytes = _target_block_bytes()

    # Small-input fast path: launch + reshape overhead beats one fused XLA multiply.
    if small_fallback and total * itemsize <= block_bytes:
        return x.astype(out_dtype) * jnp.asarray(scale, dtype=out_dtype)

    # Lane width: largest candidate that divides the element count -> no padding
    # for any tensor whose size is a multiple of 128 (the common case).
    lane_w = None
    for w in _LANE_CANDIDATES:
        if total % w == 0:
            lane_w = w
            break
    pad = 0
    if lane_w is None:
        # Rare ragged case: minimal tail pad up to one 1024-wide row boundary.
        lane_w = _LANE_CANDIDATES[0]
        pad = _round_up(total, lane_w) - total

    rows = (total + pad) // lane_w

    # Byte-based block sizing keeps every dtype at ~block_bytes per buffer.
    target_rows = max(8, block_bytes // (lane_w * itemsize))
    block_rows = min(rows, _round_up(target_rows, 32))
    if max_block_rows is not None:
        block_rows = min(block_rows, max_block_rows)
    if block_rows != rows:
        block_rows = max(8, (block_rows // 8) * 8)   # keep sublane-aligned

    x_flat = x.reshape(-1)
    if pad:
        x_flat = jnp.pad(x_flat, (0, pad))
    x2d = x_flat.reshape(rows, lane_w)

    # Partial last block is fine: Pallas masks the out-of-range writes.
    grid = (pl.cdiv(rows, block_rows),)

    # Double-buffered in + out blocks, plus headroom for compiler scratch.
    blk_live = 2 * block_rows * lane_w * (jnp.dtype(x.dtype).itemsize + out_dtype.itemsize)
    vmem_limit = min(max(32 << 20, blk_live + (16 << 20)), 56 << 20)

    # Only alias when the caller asked for it and dtypes match (in-place scale).
    io_aliases = {1: 0} if (donate_input and out_dtype == jnp.dtype(x.dtype)) else {}

    scale_arr = jnp.asarray([scale], dtype=jnp.float32)

    out2d = pl.pallas_call(
        _scale_kernel,
        out_shape=jax.ShapeDtypeStruct((rows, lane_w), out_dtype),
        grid=grid,
        in_specs=[
            pl.BlockSpec(memory_space=pltpu.SMEM),                  # scale (f32 scalar)
            pl.BlockSpec((block_rows, lane_w), lambda i: (i, 0)),   # x tile
        ],
        out_specs=pl.BlockSpec((block_rows, lane_w), lambda i: (i, 0)),
        compiler_params=pltpu.CompilerParams(
            dimension_semantics=("parallel",),
            vmem_limit_bytes=vmem_limit,
        ),
        input_output_aliases=io_aliases,
    )(scale_arr, x2d)

    out_flat = out2d.reshape(-1)
    if pad:
        out_flat = out_flat[:total]
    return out_flat.reshape(orig_shape)


if __name__ == "__main__":
    key = jax.random.PRNGKey(0)
    k1, k2, k3, k4, k5 = jax.random.split(key, 5)

    # 1) Primary check: NCHW f32 input, kernel forced on (total % 1024 == 0 -> no pad).
    x1 = jax.random.normal(k1, (2, 4, 16, 16), dtype=jnp.float32)
    y1 = jax.block_until_ready(voltage_scaler(x1, 0.7, small_fallback=False))
    ref1 = x1 * jnp.float32(0.7)
    assert y1.shape == x1.shape and y1.dtype == x1.dtype
    assert jnp.allclose(y1, ref1, rtol=1e-6, atol=1e-6)

    # Default path (small-input fast path) must agree.
    y1b = jax.block_until_ready(voltage_scaler(x1, 0.7))
    assert jnp.allclose(y1b, ref1, rtol=1e-6, atol=1e-6)

    # 2) Partial last block via the cdiv grid (44 rows, 32-row blocks).
    x2 = jax.random.normal(k2, (44, 1024), dtype=jnp.float32)
    y2 = jax.block_until_ready(
        voltage_scaler(x2, 1.25, small_fallback=False, max_block_rows=32))
    assert jnp.allclose(y2, x2 * jnp.float32(1.25), rtol=1e-6, atol=1e-6)

    # 3) Divisor-aware lane width (total = 1536 -> lane 512, no padding).
    x3 = jax.random.normal(k3, (2, 3, 16, 16), dtype=jnp.float32)
    y3 = jax.block_until_ready(voltage_scaler(x3, -0.3, small_fallback=False))
    assert jnp.allclose(y3, x3 * jnp.float32(-0.3), rtol=1e-6, atol=1e-6)

    # 4) bf16 input stays bf16 and multiplies in bf16.
    x4 = jax.random.normal(k4, (2, 4, 16, 16), dtype=jnp.float32).astype(jnp.bfloat16)
    y4 = jax.block_until_ready(voltage_scaler(x4, 0.5, small_fallback=False))
    assert y4.dtype == jnp.bfloat16
    assert jnp.allclose(y4.astype(jnp.float32),
                        (x4 * jnp.bfloat16(0.5)).astype(jnp.float32),
                        rtol=1e-2, atol=1e-2)

    # 5) Ragged element count (315) -> minimal tail pad path.
    x5 = jax.random.normal(k5, (5, 7, 9), dtype=jnp.float32)
    y5 = jax.block_until_ready(voltage_scaler(x5, 2.0, small_fallback=False))
    assert y5.shape == x5.shape
    assert jnp.allclose(y5, x5 * jnp.float32(2.0), rtol=1e-6, atol=1e-6)

    print("KERNEL_OK")
</pallas_src>

<mosaic_0001>
module attributes {stable_mosaic.version = 11 : i64} {
  func.func @_scale_kernel(%arg0: i32, %arg1: memref<1xf32, #tpu.memory_space<smem>>, %arg2: memref<2x1024xf32, #tpu.memory_space<vmem>>, %arg3: memref<2x1024xf32, #tpu.memory_space<vmem>>) attributes {dimension_semantics = [#tpu.dimension_semantics<parallel>], iteration_bounds = array<i64: 1>, scalar_prefetch = 0 : i64, scratch_operands = 0 : i64, tpu.core_type = #tpu.core_type<tc>, window_params = [{transform_indices = @transform_0, window_bounds = array<i64: 1>}, {transform_indices = @transform_1, window_bounds = array<i64: 2, 1024>}, {transform_indices = @transform_2, window_bounds = array<i64: 2, 1024>}]} {
    %c0 = arith.constant 0 : index
    %0 = memref.load %arg1[%c0] : memref<1xf32, #tpu.memory_space<smem>>
    %c0_0 = arith.constant 0 : index
    %c0_1 = arith.constant 0 : index
    %1 = vector.load %arg2[%c0_0, %c0_1] : memref<2x1024xf32, #tpu.memory_space<vmem>>, vector<2x1024xf32>
    %2 = vector.broadcast %0 : f32 to vector<2x1024xf32>
    %3 = arith.mulf %1, %2 : vector<2x1024xf32>
    %c0_2 = arith.constant 0 : index
    %c0_3 = arith.constant 0 : index
    %4 = vector.load %arg3[%c0_2, %c0_3] : memref<2x1024xf32, #tpu.memory_space<vmem>>, vector<2x1024xf32>
    tpu.vector_store %arg3[%c0_2, %c0_3], %3 {strides = array<i32>} : memref<2x1024xf32, #tpu.memory_space<vmem>>, vector<2x1024xf32>,
    return
  }
  func.func @transform_0(%arg0: i32) -> i32 {
    %c0_i32 = arith.constant 0 : i32
    %c0_i32_0 = arith.constant 0 : i32
    return %c0_i32 : i32
  }
  func.func @transform_1(%arg0: i32) -> (i32, i32) {
    %c0_i32 = arith.constant 0 : i32
    %c0_i32_0 = arith.constant 0 : i32
    return %arg0, %c0_i32 : i32, i32
  }
  func.func @transform_2(%arg0: i32) -> (i32, i32) {
    %c0_i32 = arith.constant 0 : i32
    %c0_i32_0 = arith.constant 0 : i32
    return %arg0, %c0_i32 : i32, i32
  }
}

</mosaic_0001>

<llo_original>
// kernel: tpu_custom_call.1
$region0: #{tpu_custom_call.1}
  #allocation0 [shape = 'u32[]', space=smem, size = 0x4, offset = 0x4, fixed_abs, tag = 'smem constant byte address 0x4 - core index']
  #allocation1 [shape = 'u32[144,128]{1,0:T(1,128)}', space=vmem, size = 0x12000, scoped, tag = 'internal scratch']
  #allocation2 [shape = 'f32[1]{0:T(128)S(6)}', space=smem, size = 0x200, scoped, tag = 'scoped memory for tpu_custom_call.1']
  %s0 = inlined_call_operand.<no memory space> [shape: f32[1], index: 0, kind: input, shape index: {}]
  %s1 = inlined_call_operand.hbm [shape: f32[2,1024], index: 1, kind: input, shape index: {}]
  %s2 = inlined_call_operand.hbm [shape: f32[2,1024], index: 2, kind: output, shape index: {}]
  %s3 = sld [smem:[#allocation0]]
  $region22: #{tpu_custom_call.1} parent=0
    _
  %s5 = ssub.s32 1, %s3
  %s6 = scalar_select 0, %s5, %s3
  %7 = sst [smem:[#allocation2]] %s0
  $region1: #{tpu_custom_call.1} parent=0
    #allocation3 [shape = 'u8[8192]{0}', space=vmem, size = 0x2000, scoped, tag = 'input window, operand 1, single buffered']
    #allocation4 [shape = 's32[1]{0}', space=sflag, size = 0x4, scoped, tag = 'scoped memory for tpu_custom_call.1']
    #allocation5 [shape = 's32[1]{0}', space=sflag, size = 0x4, scoped, tag = 'scoped memory for tpu_custom_call.1']
    #allocation6 [shape = 'u8[8192]{0}', space=vmem, size = 0x2000, scoped, tag = 'output window, operand 0, single buffered']
    %8 = vsyncpa [#allocation4], 0
    %9 = vsyncpa [#allocation5], 0
    // Predicated region
    $region2: #{tpu_custom_call.1} parent=1 // pred_check
      _
    $region3: #{tpu_custom_call.1} parent=1 // pred_check_branch
      %11 = sbr.rel (0) target = $region5
    $region4: #{tpu_custom_call.1} parent=1 // pred_region
      _
    $region5: #{tpu_custom_call.1} parent=1 // pred_fallthru
      _
    // Predicated region
    $region6: #{tpu_custom_call.1} parent=1 // pred_check
      _
    $region7: #{tpu_custom_call.1} parent=1 // pred_check_branch
      %13 = sbr.rel (0) target = $region9
    $region8: #{tpu_custom_call.1} parent=1 // pred_region
      %s15 = ssub.s32 256, 256
      %16 = vsyncadd [#allocation4], %s15
      %s18 = sshll.u32 [#allocation3], 4
      %s19 = int_to_ptr.vmem [resolvable:$true] %s18
      %21 = dma.hbm_to_vmem [thread:$0]  %s1, 256, %s19, [#allocation4]
    $region9: #{tpu_custom_call.1} parent=1 // pred_fallthru
      _
    // Predicated region
    $region10: #{tpu_custom_call.1} parent=1 // pred_check
      _
    $region11: #{tpu_custom_call.1} parent=1 // pred_check_branch
      %23 = sbr.rel (0) target = $region13
    $region12: #{tpu_custom_call.1} parent=1 // pred_region
      %24 = dma.done [#allocation4], 256
    $region13: #{tpu_custom_call.1} parent=1 // pred_fallthru
      _
    %s25 = sld [smem:[#allocation2]]
    %v26 = vld [vmem:[#allocation3] sm:$0xff]
    %v27 = vld [vmem:[#allocation3 + $0x8] sm:$0xff]
    %v28 = vstv %s25
    %v29 = vmul.f32 %v26, %v28
    %v30 = vmul.f32 %v27, %v28
    %31 = vst [vmem:[#allocation6] sm:$0xff] %v29
    %32 = vst [vmem:[#allocation6 + $0x8] sm:$0xff] %v30
    // Predicated region
    $region14: #{tpu_custom_call.1} parent=1 // pred_check
      _
    $region15: #{tpu_custom_call.1} parent=1 // pred_check_branch
      %34 = sbr.rel (0) target = $region17
    $region16: #{tpu_custom_call.1} parent=1 // pred_region
      %s36 = ssub.s32 256, 256
      %37 = vsyncadd [#allocation5], %s36
      %s39 = sshll.u32 [#allocation6], 4
      %s40 = int_to_ptr.vmem [resolvable:$true] %s39
      %42 = dma.vmem_to_hbm [thread:$0]  %s40, 256, %s2, [#allocation5]
    $region17: #{tpu_custom_call.1} parent=1 // pred_fallthru
      _
    // Predicated region
    $region18: #{tpu_custom_call.1} parent=1 // pred_check
      _
    $region19: #{tpu_custom_call.1} parent=1 // pred_check_branch
      %44 = sbr.rel (0) target = $region21
    $region20: #{tpu_custom_call.1} parent=1 // pred_region
      %45 = dma.done [#allocation5], 256
    $region21: #{tpu_custom_call.1} parent=1 // pred_fallthru
      _
    %46 = vsyncpa [#allocation4], 1
    %47 = vsyncpa [#allocation5], 1

</llo_original>
